<compile_context>
chip_gen: v5e
topology: v5e:2x2
jax: 0.10.0
libtpu: 0.0.40
codegen_flags: <defaults>
</compile_context>

<pallas_src>
import functools

import jax
import jax.numpy as jnp
from jax.experimental import pallas as pl
from jax.experimental.pallas import tpu as pltpu


def _group_reduce(v, op, g, c_eff):
    """Class-axis reduction when classes sit at sublane stride g.

    v: (c_eff, T) with sublane s holding class s//g of pixel-chunk s%g.
    Returns (c_eff, T) where every sublane carries the reduction over its own
    class group (wrap-around sublane-roll butterfly; c_eff // g is a power of
    two on this path, guaranteed by the wrapper).
    """
    y = v
    shift = g
    while shift < c_eff:
        y = op(y, pltpu.roll(y, shift=shift, axis=0))
        shift *= 2
    return y


def _dice_ce_stats_kernel(x_ref, lab_ref, out_ref, cls_ref, par_ref, acc_ref,
                          *, hwg, tile, n_inner, n_tiles, c, g, needs_mask):
    """Accumulate per-class statistics for Dice + weighted CE.

    x_ref:   (C*g, tile) logits (native dtype); classes on sublanes (stride g),
             pixels on lanes.
    lab_ref: (g, tile) integer labels (row j = pixel-chunk j).
    out_ref: (C*g, 4) float32 per-(batch, chunk) stats, written once at the
             last reduction step:
               col 0: sum(p * onehot)    col 1: sum(onehot)
               col 2: sum(p * p)         col 3: sum(onehot * nll)
    cls_ref/par_ref: hoisted per-sublane class-id / chunk-id constants.
    acc_ref: (C*g, 4) float32 running accumulator (VMEM scratch).
    """
    pc = pl.program_id(1)          # parallel pixel-chunk index
    t = pl.program_id(2)           # inner reduction (pixel-tile) index
    c_eff = c * g

    # Hoisted constants + per-(batch, chunk) accumulator init.
    @pl.when(t == 0)
    def _():
        acc_ref[...] = jnp.zeros_like(acc_ref)
        sub = jax.lax.broadcasted_iota(jnp.int32, cls_ref.shape, 0)
        if g > 1:
            cls_ref[...] = sub >> (g.bit_length() - 1)    # class id = s // g
            par_ref[...] = sub & (g - 1)                  # chunk id = s %  g
        else:
            cls_ref[...] = sub

    x = x_ref[...].astype(jnp.float32)                    # (c_eff, tile)

    def accumulate(xv, valid):
        cls = cls_ref[...]
        # Periodic label broadcast: row s of lab_b = labels of chunk s % g.
        if g > 1:
            par = par_ref[...]
            lab_b = lab_ref[g - 1:g, :].astype(jnp.int32)            # (1, T)
            for j in range(g - 2, -1, -1):
                row_j = lab_ref[j:j + 1, :].astype(jnp.int32)        # (1, T)
                lab_b = jnp.where(par == j, row_j, lab_b)        # (c_eff, T)
        else:
            lab_b = lab_ref[...].astype(jnp.int32)                   # (1, T)
        if valid is not None:
            lab_b = jnp.where(valid, lab_b, -1)
        onehot = (lab_b == cls).astype(jnp.float32)              # (c_eff, T)

        # Softmax over classes (stride-g sublane groups, or plain axis 0).
        if g > 1:
            m = _group_reduce(xv, jnp.maximum, g, c_eff)
        else:
            m = jnp.max(xv, axis=0, keepdims=True)
        t1 = xv - m
        e = jnp.exp(t1)
        if g > 1:
            denom = _group_reduce(e, jnp.add, g, c_eff)
        else:
            denom = jnp.sum(e, axis=0, keepdims=True)
        prob = e * pl.reciprocal(denom)
        if valid is not None:
            prob = jnp.where(valid, prob, 0.0)
        # Per-pixel NLL at this sublane's class: logsumexp(x) - x[class].
        nll = jnp.log(denom) - t1

        # Lane reductions -> (c_eff, 1) columns of the running accumulator.
        acc_ref[:, 0:1] += jnp.sum(prob * onehot, axis=-1, keepdims=True)
        acc_ref[:, 1:2] += jnp.sum(onehot, axis=-1, keepdims=True)
        acc_ref[:, 2:3] += jnp.sum(prob * prob, axis=-1, keepdims=True)
        acc_ref[:, 3:4] += jnp.sum(onehot * nll, axis=-1, keepdims=True)

    if not needs_mask:
        accumulate(x, None)
    else:
        # Only the globally-last pixel tile pays the ragged-tile mask.
        is_last = (pc * n_inner + t) == (n_tiles - 1)

        @pl.when(jnp.logical_not(is_last))
        def _():
            accumulate(x, None)

        @pl.when(is_last)
        def _():
            col = (jax.lax.broadcasted_iota(jnp.int32, (1, tile), 1)
                   + (n_tiles - 1) * tile)
            valid = col < hwg
            accumulate(jnp.where(valid, x, 0.0), valid)

    # Single write-back of the accumulated stats at the last reduction step.
    @pl.when(t == n_inner - 1)
    def _():
        out_ref[...] = acc_ref[...]


def dice_ce_loss(predict, label, *, num_classes, alpha=1.0,
                 max_pixels_per_tile=None):
    """predict: [B, C, H, W] float logits; label: [B, 1, H, W] int class map."""
    b, c, h, w = predict.shape
    assert c == num_classes, "channel dim must equal num_classes"
    hw = h * w

    # --- sublane packing: fill all 8 f32 sublanes when C < 8 ----------------
    g = 1
    if 2 <= c < 8 and 8 % c == 0 and hw % (8 // c) == 0:
        g = 8 // c
    c_eff = c * g
    hwg = hw // g

    # Free, contiguous reshapes: native NCHW layout, native dtypes (labels
    # keep their narrow integer dtype; in-kernel upcast).
    x = predict.reshape(b, c_eff, hwg)
    lab = label.reshape(b, g, hwg)
    if (not jnp.issubdtype(lab.dtype, jnp.integer)) or lab.dtype.itemsize > 4:
        lab = lab.astype(jnp.int32)

    # --- VMEM-budget-aware pixel tile (lane extent) --------------------------
    try:
        info = pltpu.get_tpu_info()
        vmem_cap = int(getattr(info, "vmem_capacity_bytes", 0)) or (64 << 20)
    except Exception:
        vmem_cap = 64 << 20
    vmem_limit = min(int(vmem_cap * 0.85), 100 << 20)

    per_col = (2 * c_eff * predict.dtype.itemsize     # double-buffered logits
               + 2 * 8 * max(lab.dtype.itemsize, 4)   # sublane-padded labels
               + 2 * c_eff * 4                        # class/chunk-id scratch
               + 6 * c_eff * 4)                       # live f32 temporaries
    t_budget = max(128, (vmem_limit // 2) // per_col)
    pixel_cap = (max_pixels_per_tile if max_pixels_per_tile is not None
                 else (131072 if c_eff <= 8 else 32768))
    t_cap = max(128, pixel_cap // g)
    tile = min(t_budget, t_cap)
    if hwg <= tile:
        tile, n_tiles = hwg, 1            # full extent: no ragged tile
    else:
        tile = (tile // 128) * 128
        n_tiles = pl.cdiv(hwg, tile)
    needs_mask = (n_tiles * tile) != hwg

    # --- parallel pixel-chunk axis (keeps both v7x TensorCores busy) --------
    p_chunks = 2 if (n_tiles >= 2 and n_tiles % 2 == 0) else 1
    n_inner = n_tiles // p_chunks

    kernel = functools.partial(
        _dice_ce_stats_kernel, hwg=hwg, tile=tile, n_inner=n_inner,
        n_tiles=n_tiles, c=c, g=g, needs_mask=needs_mask)

    partials = pl.pallas_call(
        kernel,
        out_shape=jax.ShapeDtypeStruct((b * p_chunks, c_eff, 4), jnp.float32),
        grid_spec=pltpu.PrefetchScalarGridSpec(
            num_scalar_prefetch=0,
            grid=(b, p_chunks, n_inner),
            in_specs=[
                pl.BlockSpec((None, c_eff, tile),
                             lambda i, p, t: (i, 0, p * n_inner + t)),
                pl.BlockSpec((None, g, tile),
                             lambda i, p, t: (i, 0, p * n_inner + t)),
            ],
            out_specs=pl.BlockSpec((None, c_eff, 4),
                                   lambda i, p, t: (i * p_chunks + p, 0, 0)),
            scratch_shapes=[
                pltpu.VMEM((c_eff, tile), jnp.int32),    # class id / sublane
                pltpu.VMEM((c_eff, tile) if g > 1 else (8, 128),
                           jnp.int32),                   # chunk id / sublane
                pltpu.VMEM((c_eff, 4), jnp.float32),     # stats accumulator
            ],
        ),
        compiler_params=pltpu.CompilerParams(
            dimension_semantics=("parallel", "parallel", "arbitrary"),
            vmem_limit_bytes=vmem_limit),
    )(x, lab)

    # --- tiny scalar epilogue in plain JAX -----------------------------------
    stats = jnp.sum(partials, axis=0)                     # (c_eff, 4)
    if g > 1:
        stats = stats.reshape(c, g, 4).sum(axis=1)        # (c, 4)
    intersect, count, sumpp, nll_c = (stats[:, 0], stats[:, 1],
                                      stats[:, 2], stats[:, 3])

    # DiceLoss: mean over classes of (1 - dice_c).
    smooth = 1e-4
    dice = (2.0 * intersect + smooth) / (count + sumpp + smooth)
    diceloss = jnp.sum(1.0 - dice) / num_classes

    # WeightedCrossEntropyLoss: weight_c = 1 - count_c / total, torch-style
    # weighted-mean reduction.
    total = jnp.sum(count)
    weight = 1.0 - count / total
    celoss = jnp.sum(weight * nll_c) / jnp.sum(weight * count)
    return celoss + alpha * diceloss


def _dice_ce_loss_ref(predict, label, *, num_classes, alpha=1.0):
    """Pure-JAX reference matching the PyTorch module."""
    b, c, h, w = predict.shape
    p = jax.nn.softmax(predict.astype(jnp.float32), axis=1)
    lab = label.reshape(b, h, w).astype(jnp.int32)
    onehot = (lab[:, None] == jnp.arange(c)[None, :, None, None]).astype(jnp.float32)

    smooth = 1e-4
    dl = 0.0
    for i in range(c):
        inter = jnp.sum(p[:, i] * onehot[:, i])
        d = (2.0 * inter + smooth) / (
            jnp.sum(onehot[:, i]) + jnp.sum(p[:, i] ** 2) + smooth)
        dl += 1.0 - d
    dl = dl / num_classes

    counts = jnp.stack([jnp.sum(lab == i).astype(jnp.float32) for i in range(c)])
    weight = 1.0 - counts / jnp.sum(counts)
    logp = jax.nn.log_softmax(predict.astype(jnp.float32), axis=1)
    nll = -jnp.take_along_axis(logp, lab[:, None], axis=1)[:, 0]
    wn = weight[lab]
    ce = jnp.sum(wn * nll) / jnp.sum(wn)
    return ce + alpha * dl


if __name__ == "__main__":
    num_classes = 4
    alpha = 1.0
    key = jax.random.PRNGKey(0)
    k1, k2, k3, k4 = jax.random.split(key, 4)

    # Test 1: B=2, C=4, 16x16 -> sublane-packed (g=2), single full-extent tile.
    B, H, W = 2, 16, 16
    predict = jax.random.normal(k1, (B, num_classes, H, W), dtype=jnp.float32)
    label = jax.random.randint(k2, (B, 1, H, W), 0, num_classes, dtype=jnp.int32)
    loss = jax.block_until_ready(
        dice_ce_loss(predict, label, num_classes=num_classes, alpha=alpha))
    ref = _dice_ce_loss_ref(predict, label, num_classes=num_classes, alpha=alpha)
    assert jnp.allclose(loss, ref, rtol=1e-4, atol=1e-5), (loss, ref)

    # Test 2: ragged multi-tile + two parallel pixel chunks (mask only on the
    # globally-last tile; the other chunk runs the unmasked fast path).
    H2, W2 = 16, 18
    predict2 = jax.random.normal(k3, (1, num_classes, H2, W2), dtype=jnp.float32)
    label2 = jax.random.randint(k4, (1, 1, H2, W2), 0, num_classes,
                                dtype=jnp.int32)
    loss2 = jax.block_until_ready(
        dice_ce_loss(predict2, label2, num_classes=num_classes, alpha=alpha,
                     max_pixels_per_tile=256))
    ref2 = _dice_ce_loss_ref(predict2, label2, num_classes=num_classes,
                             alpha=alpha)
    assert jnp.allclose(loss2, ref2, rtol=1e-4, atol=1e-5), (loss2, ref2)

    print("KERNEL_OK")
</pallas_src>

<mosaic_0001>
module attributes {stable_mosaic.version = 11 : i64} {
  func.func @_dice_ce_stats_kernel(%arg0: i32, %arg1: i32, %arg2: i32, %arg3: memref<1x8x128xf32, #tpu.memory_space<vmem>>, %arg4: memref<1x2x128xi32, #tpu.memory_space<vmem>>, %arg5: memref<1x8x4xf32, #tpu.memory_space<vmem>>, %arg6: memref<8x128xi32, #tpu.memory_space<vmem>>, %arg7: memref<8x128xi32, #tpu.memory_space<vmem>>, %arg8: memref<8x4xf32, #tpu.memory_space<vmem>>) attributes {dimension_semantics = [#tpu.dimension_semantics<parallel>, #tpu.dimension_semantics<parallel>, #tpu.dimension_semantics<arbitrary>], iteration_bounds = array<i64: 2, 1, 1>, scalar_prefetch = 0 : i64, scratch_operands = 3 : i64, tpu.core_type = #tpu.core_type<tc>, window_params = [{transform_indices = @transform_0, window_bounds = array<i64: 1, 8, 128>}, {transform_indices = @transform_1, window_bounds = array<i64: 1, 2, 128>}, {transform_indices = @transform_2, window_bounds = array<i64: 1, 8, 4>}]} {
    %c0_i32 = arith.constant 0 : i32
    %0 = arith.cmpi eq, %arg2, %c0_i32 : i32
    %1 = arith.extui %0 : i1 to i32
    %c0_i32_0 = arith.constant 0 : i32
    %2 = arith.cmpi ne, %1, %c0_i32_0 : i32
    scf.if %2 {
      %cst_34 = arith.constant 0.000000e+00 : f32
      %61 = vector.broadcast %cst_34 : f32 to vector<8x4xf32>
      %c0_35 = arith.constant 0 : index
      %c0_36 = arith.constant 0 : index
      %62 = vector.load %arg8[%c0_35, %c0_36] : memref<8x4xf32, #tpu.memory_space<vmem>>, vector<8x4xf32>
      tpu.vector_store %arg8[%c0_35, %c0_36], %61 {strides = array<i32>} : memref<8x4xf32, #tpu.memory_space<vmem>>, vector<8x4xf32>,
      %63 = tpu.iota {dimensions = array<i32: 0>} : vector<8x128xi32>
      %c1_i32 = arith.constant 1 : i32
      %64 = vector.broadcast %c1_i32 : i32 to vector<8x128xi32>
      %65 = arith.shrsi %63, %64 : vector<8x128xi32>
      %c0_37 = arith.constant 0 : index
      %c0_38 = arith.constant 0 : index
      %66 = vector.load %arg6[%c0_37, %c0_38] : memref<8x128xi32, #tpu.memory_space<vmem>>, vector<8x128xi32>
      tpu.vector_store %arg6[%c0_37, %c0_38], %65 {strides = array<i32>} : memref<8x128xi32, #tpu.memory_space<vmem>>, vector<8x128xi32>,
      %c1_i32_39 = arith.constant 1 : i32
      %67 = vector.broadcast %c1_i32_39 : i32 to vector<8x128xi32>
      %68 = arith.andi %63, %67 : vector<8x128xi32>
      %c0_40 = arith.constant 0 : index
      %c0_41 = arith.constant 0 : index
      %69 = vector.load %arg7[%c0_40, %c0_41] : memref<8x128xi32, #tpu.memory_space<vmem>>, vector<8x128xi32>
      tpu.vector_store %arg7[%c0_40, %c0_41], %68 {strides = array<i32>} : memref<8x128xi32, #tpu.memory_space<vmem>>, vector<8x128xi32>,
    } else {
    }
    %c0 = arith.constant 0 : index
    %c0_1 = arith.constant 0 : index
    %c0_2 = arith.constant 0 : index
    %3 = vector.load %arg3[%c0, %c0_1, %c0_2] : memref<1x8x128xf32, #tpu.memory_space<vmem>>, vector<1x8x128xf32>
    %4 = vector.shape_cast %3 : vector<1x8x128xf32> to vector<8x128xf32>
    %c0_3 = arith.constant 0 : index
    %c0_4 = arith.constant 0 : index
    %5 = vector.load %arg6[%c0_3, %c0_4] : memref<8x128xi32, #tpu.memory_space<vmem>>, vector<8x128xi32>
    %c0_5 = arith.constant 0 : index
    %c0_6 = arith.constant 0 : index
    %6 = vector.load %arg7[%c0_5, %c0_6] : memref<8x128xi32, #tpu.memory_space<vmem>>, vector<8x128xi32>
    %c0_7 = arith.constant 0 : index
    %c1 = arith.constant 1 : index
    %c0_8 = arith.constant 0 : index
    %7 = vector.load %arg4[%c0_7, %c1, %c0_8] : memref<1x2x128xi32, #tpu.memory_space<vmem>>, vector<1x1x128xi32>
    %8 = vector.shape_cast %7 : vector<1x1x128xi32> to vector<1x128xi32>
    %c0_9 = arith.constant 0 : index
    %c0_10 = arith.constant 0 : index
    %c0_11 = arith.constant 0 : index
    %9 = vector.load %arg4[%c0_9, %c0_10, %c0_11] : memref<1x2x128xi32, #tpu.memory_space<vmem>>, vector<1x1x128xi32>
    %10 = vector.shape_cast %9 : vector<1x1x128xi32> to vector<1x128xi32>
    %c0_i32_12 = arith.constant 0 : i32
    %11 = vector.broadcast %c0_i32_12 : i32 to vector<8x128xi32>
    %12 = arith.cmpi eq, %6, %11 : vector<8x128xi32>
    %13 = vector.shape_cast %10 : vector<1x128xi32> to vector<1x128xi32>
    %14 = vector.broadcast %13 : vector<1x128xi32> to vector<8x128xi32>
    %15 = vector.shape_cast %8 : vector<1x128xi32> to vector<1x128xi32>
    %16 = vector.broadcast %15 : vector<1x128xi32> to vector<8x128xi32>
    %17 = arith.select %12, %14, %16 : vector<8x128xi1>, vector<8x128xi32>
    %18 = arith.cmpi eq, %17, %5 : vector<8x128xi32>
    %19 = arith.extui %18 : vector<8x128xi1> to vector<8x128xi32>
    %20 = arith.sitofp %19 : vector<8x128xi32> to vector<8x128xf32>
    %c2_i32 = arith.constant 2 : i32
    %21 = tpu.dynamic_rotate %4 by %c2_i32 dim 0 : vector<8x128xf32>, i32 -> vector<8x128xf32>
    %22 = arith.maximumf %4, %21 : vector<8x128xf32>
    %c4_i32 = arith.constant 4 : i32
    %23 = tpu.dynamic_rotate %22 by %c4_i32 dim 0 : vector<8x128xf32>, i32 -> vector<8x128xf32>
    %24 = arith.maximumf %22, %23 : vector<8x128xf32>
    %25 = arith.subf %4, %24 : vector<8x128xf32>
    %26 = math.exp %25 : vector<8x128xf32>
    %c2_i32_13 = arith.constant 2 : i32
    %27 = tpu.dynamic_rotate %26 by %c2_i32_13 dim 0 : vector<8x128xf32>, i32 -> vector<8x128xf32>
    %28 = arith.addf %26, %27 : vector<8x128xf32>
    %c4_i32_14 = arith.constant 4 : i32
    %29 = tpu.dynamic_rotate %28 by %c4_i32_14 dim 0 : vector<8x128xf32>, i32 -> vector<8x128xf32>
    %30 = arith.addf %28, %29 : vector<8x128xf32>
    %31 = tpu.reciprocal %30 : vector<8x128xf32> -> vector<8x128xf32>
    %32 = arith.mulf %26, %31 : vector<8x128xf32>
    %33 = math.log %30 : vector<8x128xf32>
    %34 = arith.subf %33, %25 : vector<8x128xf32>
    %c0_15 = arith.constant 0 : index
    %c0_16 = arith.constant 0 : index
    %35 = vector.load %arg8[%c0_15, %c0_16] : memref<8x4xf32, #tpu.memory_space<vmem>>, vector<8x1xf32>
    %36 = arith.mulf %32, %20 : vector<8x128xf32>
    %cst = arith.constant dense<0.000000e+00> : vector<8xf32>
    %37 = vector.multi_reduction <add>, %36, %cst [1] : vector<8x128xf32> to vector<8xf32>
    %38 = vector.shape_cast %37 : vector<8xf32> to vector<8x1xf32>
    %39 = arith.addf %35, %38 : vector<8x1xf32>
    %c0_17 = arith.constant 0 : index
    %c0_18 = arith.constant 0 : index
    %40 = vector.load %arg8[%c0_17, %c0_18] : memref<8x4xf32, #tpu.memory_space<vmem>>, vector<8x1xf32>
    tpu.vector_store %arg8[%c0_17, %c0_18], %39 {strides = array<i32>} : memref<8x4xf32, #tpu.memory_space<vmem>>, vector<8x1xf32>,
    %c0_19 = arith.constant 0 : index
    %c1_20 = arith.constant 1 : index
    %41 = vector.load %arg8[%c0_19, %c1_20] : memref<8x4xf32, #tpu.memory_space<vmem>>, vector<8x1xf32>
    %cst_21 = arith.constant dense<0.000000e+00> : vector<8xf32>
    %42 = vector.multi_reduction <add>, %20, %cst_21 [1] : vector<8x128xf32> to vector<8xf32>
    %43 = vector.shape_cast %42 : vector<8xf32> to vector<8x1xf32>
    %44 = arith.addf %41, %43 : vector<8x1xf32>
    %c0_22 = arith.constant 0 : index
    %c1_23 = arith.constant 1 : index
    %45 = vector.load %arg8[%c0_22, %c1_23] : memref<8x4xf32, #tpu.memory_space<vmem>>, vector<8x1xf32>
    tpu.vector_store %arg8[%c0_22, %c1_23], %44 {strides = array<i32>} : memref<8x4xf32, #tpu.memory_space<vmem>>, vector<8x1xf32>,
    %c0_24 = arith.constant 0 : index
    %c2 = arith.constant 2 : index
    %46 = vector.load %arg8[%c0_24, %c2] : memref<8x4xf32, #tpu.memory_space<vmem>>, vector<8x1xf32>
    %47 = arith.mulf %32, %32 : vector<8x128xf32>
    %cst_25 = arith.constant dense<0.000000e+00> : vector<8xf32>
    %48 = vector.multi_reduction <add>, %47, %cst_25 [1] : vector<8x128xf32> to vector<8xf32>
    %49 = vector.shape_cast %48 : vector<8xf32> to vector<8x1xf32>
    %50 = arith.addf %46, %49 : vector<8x1xf32>
    %c0_26 = arith.constant 0 : index
    %c2_27 = arith.constant 2 : index
    %51 = vector.load %arg8[%c0_26, %c2_27] : memref<8x4xf32, #tpu.memory_space<vmem>>, vector<8x1xf32>
    tpu.vector_store %arg8[%c0_26, %c2_27], %50 {strides = array<i32>} : memref<8x4xf32, #tpu.memory_space<vmem>>, vector<8x1xf32>,
    %c0_28 = arith.constant 0 : index
    %c3 = arith.constant 3 : index
    %52 = vector.load %arg8[%c0_28, %c3] : memref<8x4xf32, #tpu.memory_space<vmem>>, vector<8x1xf32>
    %53 = arith.mulf %20, %34 : vector<8x128xf32>
    %cst_29 = arith.constant dense<0.000000e+00> : vector<8xf32>
    %54 = vector.multi_reduction <add>, %53, %cst_29 [1] : vector<8x128xf32> to vector<8xf32>
    %55 = vector.shape_cast %54 : vector<8xf32> to vector<8x1xf32>
    %56 = arith.addf %52, %55 : vector<8x1xf32>
    %c0_30 = arith.constant 0 : index
    %c3_31 = arith.constant 3 : index
    %57 = vector.load %arg8[%c0_30, %c3_31] : memref<8x4xf32, #tpu.memory_space<vmem>>, vector<8x1xf32>
    tpu.vector_store %arg8[%c0_30, %c3_31], %56 {strides = array<i32>} : memref<8x4xf32, #tpu.memory_space<vmem>>, vector<8x1xf32>,
    %c0_i32_32 = arith.constant 0 : i32
    %58 = arith.cmpi eq, %arg2, %c0_i32_32 : i32
    %59 = arith.extui %58 : i1 to i32
    %c0_i32_33 = arith.constant 0 : i32
    %60 = arith.cmpi ne, %59, %c0_i32_33 : i32
    scf.if %60 {
      %c0_34 = arith.constant 0 : index
      %c0_35 = arith.constant 0 : index
      %61 = vector.load %arg8[%c0_34, %c0_35] : memref<8x4xf32, #tpu.memory_space<vmem>>, vector<8x4xf32>
      %c0_36 = arith.constant 0 : index
      %c0_37 = arith.constant 0 : index
      %c0_38 = arith.constant 0 : index
      %62 = vector.load %arg5[%c0_36, %c0_37, %c0_38] : memref<1x8x4xf32, #tpu.memory_space<vmem>>, vector<1x8x4xf32>
      %63 = vector.shape_cast %62 : vector<1x8x4xf32> to vector<8x4xf32>
      %64 = vector.shape_cast %61 : vector<8x4xf32> to vector<1x8x4xf32>
      tpu.vector_store %arg5[%c0_36, %c0_37, %c0_38], %64 {strides = array<i32>} : memref<1x8x4xf32, #tpu.memory_space<vmem>>, vector<1x8x4xf32>,
    } else {
    }
    return
  }
  func.func @transform_0(%arg0: i32, %arg1: i32, %arg2: i32) -> (i32, i32, i32) {
    %c1_i32 = arith.constant 1 : i32
    %0 = arith.muli %arg1, %c1_i32 : i32
    %1 = arith.addi %0, %arg2 : i32
    %c0_i32 = arith.constant 0 : i32
    %c0_i32_0 = arith.constant 0 : i32
    return %arg0, %c0_i32, %1 : i32, i32, i32
  }
  func.func @transform_1(%arg0: i32, %arg1: i32, %arg2: i32) -> (i32, i32, i32) {
    %c1_i32 = arith.constant 1 : i32
    %0 = arith.muli %arg1, %c1_i32 : i32
    %1 = arith.addi %0, %arg2 : i32
    %c0_i32 = arith.constant 0 : i32
    %c0_i32_0 = arith.constant 0 : i32
    return %arg0, %c0_i32, %1 : i32, i32, i32
  }
  func.func @transform_2(%arg0: i32, %arg1: i32, %arg2: i32) -> (i32, i32, i32) {
    %c1_i32 = arith.constant 1 : i32
    %0 = arith.muli %arg0, %c1_i32 : i32
    %1 = arith.addi %0, %arg1 : i32
    %c0_i32 = arith.constant 0 : i32
    %c0_i32_0 = arith.constant 0 : i32
    %c0_i32_1 = arith.constant 0 : i32
    return %1, %c0_i32, %c0_i32_0 : i32, i32, i32
  }
}

</mosaic_0001>

<llo_original>
// kernel: tpu_custom_call.1
$region0: #{tpu_custom_call.1}
  #allocation0 [shape = 'u32[]', space=smem, size = 0x4, offset = 0x4, fixed_abs, tag = 'smem constant byte address 0x4 - core index']
  #allocation1 [shape = 'u32[72,128]{1,0:T(1,128)}', space=vmem, size = 0x9000, scoped, tag = 'internal scratch']
  #allocation2 [shape = 's32[8,128]{1,0:T(8,128)}', space=vmem, size = 0x1000, scoped, tag = 'scratch operand']
  #allocation3 [shape = 's32[8,128]{1,0:T(8,128)}', space=vmem, size = 0x1000, scoped, tag = 'scratch operand']
  #allocation4 [shape = 'f32[8,4]{1,0:T(8,128)}', space=vmem, size = 0x1000, scoped, tag = 'scratch operand']
  %s0 = inlined_call_operand.hbm [shape: f32[2,8,128], index: 0, kind: input, shape index: {}]
  %s1 = inlined_call_operand.hbm [shape: s32[2,2,128], index: 1, kind: input, shape index: {}]
  %s2 = inlined_call_operand.vmem [shape: f32[2,8,4], index: 2, kind: output, shape index: {}]
  %s3 = sld [smem:[#allocation0]]
  $region57: #{tpu_custom_call.1} parent=0
    _
  %s5 = ssub.s32 1, %s3
  %s6 = scalar_select 0, %s5, %s3
  $region1: #{tpu_custom_call.1} parent=0
    #allocation5 [shape = 'u8[8192]{0}', space=vmem, size = 0x2000, scoped, tag = 'input window, operand 0']
    #allocation6 [shape = 's32[2]{0}', space=sflag, size = 0x8, scoped, tag = 'scoped memory for tpu_custom_call.1']
    #allocation7 [shape = 'u8[2048]{0}', space=vmem, size = 0x800, scoped, tag = 'input window, operand 1']
    #allocation8 [shape = 's32[2]{0}', space=sflag, size = 0x8, scoped, tag = 'scoped memory for tpu_custom_call.1']
    %7 = vsyncpa [#allocation6], 0
    %s8 = scalar_lea.sflag [#allocation6], 1
    %9 = vsyncpa %s8, 0
    %10 = vsyncpa [#allocation8], 0
    %s11 = scalar_lea.sflag [#allocation8], 1
    %12 = vsyncpa %s11, 0
    loop: start=0, step=1, limit=4
    $region2: #{tpu_custom_call.1} parent=1 // loop_pre_header
      _
    $region3: #{tpu_custom_call.1} parent=1 // loop_header
      %s14 = sphi 0, %s18
      %p15 = scmp.ge.s32.totalorder %s14, 4
      %s21 = sphi 0, %s40
      %s22 = sphi 0, %s36
      %s23 = sphi 0, %s32
      %s24 = sphi 0, %s21
      %s25 = sphi 0, %s22
      %s26 = sphi 0, %s23
      %s27 = sphi 0, %s24
      %s28 = sphi 0, %s25
      %s29 = sphi 0, %s26
      %s47 = sphi 0, %s49
      %s50 = sphi 0, %s47
      %s51 = sphi 0, %s50
      %s67 = sphi 0, %s51
      %s77 = sphi 0, %s79
      %s80 = sphi 0, %s77
      %s81 = sphi 0, %s80
      %s97 = sphi 0, %s81
      %s105 = sphi 0, %s107
      %s108 = sphi 0, %s105
      %s109 = sphi 0, %s108
      %s125 = sphi 0, %s109
    $region4: #{tpu_custom_call.1} parent=1 // loop_header_branch
      %17 = sbr.rel (%p15) target = $region8
    $region5: #{tpu_custom_call.1} parent=1 // loop_body
      %s19 = ssub.s32 %s14, 1
      %s20 = ssub.s32 %s14, 2
      %s30 = sadd.s32 1, %s23
      %p31 = scmp.ge.s32.totalorder %s30, 1
      %s32 = scalar_select %p31, 0, %s30
      %s33 = sadd.s32 1, %s22
      %s34 = scalar_select %p31, %s33, %s22
      %p35 = scmp.ge.s32.totalorder %s34, 1
      %s36 = scalar_select %p35, 0, %s34
      %s37 = sadd.s32 1, %s21
      %s38 = scalar_select %p35, %s37, %s21
      %p39 = scmp.ge.s32.totalorder %s38, 2
      %s40 = scalar_select %p39, 0, %s38
      %s41 = sadd.s32 %s22, %s23
      %s42 = sadd.s32 %s36, %s32
      %s43 = ssub.s32 %s21, %s40
      %s44 = ssub.s32 %s41, %s42
      %s45 = sor.u32 %s43, %s44
      %p46 = scmp.eq.s32.totalorder %s45, 0
      %s48 = sadd.s32 %s47, 1
      %s49 = scalar_select %p46, %s47, %s48
      %p52 = pneg %p46
      %p53 = scmp.eq.s32.totalorder %s14, 1
      %p54 = por %p52, %p53
      %p55 = scmp.ne.s32.totalorder %s47, %s50
      %p56 = scmp.eq.s32.totalorder %s14, 0
      %p57 = por %p55, %p56
      %p58 = scmp.ne.s32.totalorder %s47, %s50
      %p59 = scmp.eq.s32.totalorder %s19, 1
      %p60 = por %p58, %p59
      %p61 = scmp.ne.s32.totalorder %s50, %s51
      %p62 = scmp.eq.s32.totalorder %s19, 0
      %p63 = por %p61, %p62
      %p64 = scmp.ne.s32.totalorder %s50, %s51
      %p65 = scmp.eq.s32.totalorder %s20, 1
      %p66 = por %p64, %p65
      %p68 = scmp.ne.s32.totalorder %s51, %s67
      %p69 = scmp.eq.s32.totalorder %s20, 0
      %p70 = por %p68, %p69
      %s71 = sadd.s32 %s22, %s23
      %s72 = sadd.s32 %s36, %s32
      %s73 = ssub.s32 %s21, %s40
      %s74 = ssub.s32 %s71, %s72
      %s75 = sor.u32 %s73, %s74
      %p76 = scmp.eq.s32.totalorder %s75, 0
      %s78 = sadd.s32 %s77, 1
      %s79 = scalar_select %p76, %s77, %s78
      %p82 = pneg %p76
      %p83 = scmp.eq.s32.totalorder %s14, 1
      %p84 = por %p82, %p83
      %p85 = scmp.ne.s32.totalorder %s77, %s80
      %p86 = scmp.eq.s32.totalorder %s14, 0
      %p87 = por %p85, %p86
      %p88 = scmp.ne.s32.totalorder %s77, %s80
      %p89 = scmp.eq.s32.totalorder %s19, 1
      %p90 = por %p88, %p89
      %p91 = scmp.ne.s32.totalorder %s80, %s81
      %p92 = scmp.eq.s32.totalorder %s19, 0
      %p93 = por %p91, %p92
      %p94 = scmp.ne.s32.totalorder %s80, %s81
      %p95 = scmp.eq.s32.totalorder %s20, 1
      %p96 = por %p94, %p95
      %p98 = scmp.ne.s32.totalorder %s81, %s97
      %p99 = scmp.eq.s32.totalorder %s20, 0
      %p100 = por %p98, %p99
      %s101 = sadd.s32 %s21, %s22
      %s102 = sadd.s32 %s40, %s36
      %s103 = ssub.s32 %s101, %s102
      %p104 = scmp.eq.s32.totalorder %s103, 0
      %s106 = sadd.s32 %s105, 1
      %s107 = scalar_select %p104, %s105, %s106
      %p110 = pneg %p104
      %p111 = scmp.eq.s32.totalorder %s14, 1
      %p112 = por %p110, %p111
      %p113 = scmp.ne.s32.totalorder %s105, %s108
      %p114 = scmp.eq.s32.totalorder %s14, 0
      %p115 = por %p113, %p114
      %p116 = scmp.ne.s32.totalorder %s105, %s108
      %p117 = scmp.eq.s32.totalorder %s19, 1
      %p118 = por %p116, %p117
      %p119 = scmp.ne.s32.totalorder %s108, %s109
      %p120 = scmp.eq.s32.totalorder %s19, 0
      %p121 = por %p119, %p120
      %p122 = scmp.ne.s32.totalorder %s108, %s109
      %p123 = scmp.eq.s32.totalorder %s20, 1
      %p124 = por %p122, %p123
      %p126 = scmp.ne.s32.totalorder %s109, %s125
      %p127 = scmp.eq.s32.totalorder %s20, 0
      %p128 = por %p126, %p127
      %p129 = scmp.le.s32.totalorder 1, %s14
      %p130 = scmp.lt.s32.totalorder %s14, 3
      %p131 = pnand %p129, %p130
      %p132 = pneg %p131
      // Predicated region
      $region9: #{tpu_custom_call.1} parent=5 // pred_check
        _
      $region10: #{tpu_custom_call.1} parent=5 // pred_check_branch
        %134 = sbr.rel (%p131) target = $region12
      $region11: #{tpu_custom_call.1} parent=5 // pred_region
        %s135 = ssub.s32 %s14, 1
      $region12: #{tpu_custom_call.1} parent=5 // pred_fallthru
        _
      %p136 = scmp.lt.s32.totalorder %s14, 2
      // Predicated region
      $region13: #{tpu_custom_call.1} parent=5 // pred_check
        %p137 = pneg %p136
      $region14: #{tpu_custom_call.1} parent=5 // pred_check_branch
        %139 = sbr.rel (%p137) target = $region16
      $region15: #{tpu_custom_call.1} parent=5 // pred_region
        // Predicated region
        $region17: #{tpu_custom_call.1} parent=15 // pred_check
          %p140 = pneg %p57
        $region18: #{tpu_custom_call.1} parent=15 // pred_check_branch
          %142 = sbr.rel (%p140) target = $region20
        $region19: #{tpu_custom_call.1} parent=15 // pred_region
          %s143 = sand.u32 %s47, 1
          %s144 = scalar_lea.sflag [#allocation6], %s143
          %s145 = sand.u32 %s47, 1
          %s146 = smul.addr %s145, 8
          %s147 = scalar_lea.vmem [#allocation5], %s146
          %s148 = sadd.s32 %s22, %s23
          %150 = vsyncadd %s144, 0
          %s151 = sadd.s32 %s148, %s21
          %s152 = smul.addr %s151, 8
          %s153 = scalar_lea.hbm %s0, %s152
          %s155 = sshll.u32 %s153, 4
          %s156 = int_to_ptr.hbm [resolvable:$true] %s155
          %s157 = sshll.u32 %s147, 4
          %s158 = int_to_ptr.vmem [resolvable:$true] %s157
          %160 = dma.hbm_to_vmem [thread:$0]  %s156, 128, %s158, %s144
        $region20: #{tpu_custom_call.1} parent=15 // pred_fallthru
          _
        // Predicated region
        $region21: #{tpu_custom_call.1} parent=15 // pred_check
          %p161 = pneg %p87
        $region22: #{tpu_custom_call.1} parent=15 // pred_check_branch
          %163 = sbr.rel (%p161) target = $region24
        $region23: #{tpu_custom_call.1} parent=15 // pred_region
          %s164 = sand.u32 %s77, 1
          %s165 = scalar_lea.sflag [#allocation8], %s164
          %s166 = sand.u32 %s77, 1
          %s167 = smul.addr %s166, 2
          %s168 = scalar_lea.vmem [#allocation7], %s167
          %s169 = sadd.s32 %s22, %s23
          %171 = vsyncadd %s165, 0
          %s172 = sadd.s32 %s169, %s21
          %s173 = smul.addr %s172, 2
          %s174 = scalar_lea.hbm %s1, %s173
          %s176 = sshll.u32 %s174, 4
          %s177 = int_to_ptr.hbm [resolvable:$true] %s176
          %s178 = sshll.u32 %s168, 4
          %s179 = int_to_ptr.vmem [resolvable:$true] %s178
          %181 = dma.hbm_to_vmem [thread:$0]  %s177, 32, %s179, %s165
        $region24: #{tpu_custom_call.1} parent=15 // pred_fallthru
          _
      $region16: #{tpu_custom_call.1} parent=5 // pred_fallthru
        _
      %p182 = scmp.le.s32.totalorder 1, %s14
      %p183 = scmp.lt.s32.totalorder %s14, 3
      %p184 = pnand %p182, %p183
      %p185 = pneg %p184
      // Predicated region
      $region25: #{tpu_custom_call.1} parent=5 // pred_check
        _
      $region26: #{tpu_custom_call.1} parent=5 // pred_check_branch
        %187 = sbr.rel (%p184) target = $region28
      $region27: #{tpu_custom_call.1} parent=5 // pred_region
        %s188 = ssub.s32 %s14, 1
        %s189 = sand.u32 %s50, 1
        %s190 = scalar_lea.sflag [#allocation6], %s189
        %s191 = sand.u32 %s50, 1
        %s192 = smul.addr %s191, 8
        %s193 = scalar_lea.vmem [#allocation5], %s192
        // Predicated region
        $region29: #{tpu_custom_call.1} parent=27 // pred_check
          %p194 = pneg %p63
        $region30: #{tpu_custom_call.1} parent=27 // pred_check_branch
          %196 = sbr.rel (%p194) target = $region32
        $region31: #{tpu_custom_call.1} parent=27 // pred_region
          %198 = dma.done %s190, 128
        $region32: #{tpu_custom_call.1} parent=27 // pred_fallthru
          _
        %s199 = sand.u32 %s80, 1
        %s200 = scalar_lea.sflag [#allocation8], %s199
        %s201 = sand.u32 %s80, 1
        %s202 = smul.addr %s201, 2
        %s203 = scalar_lea.vmem [#allocation7], %s202
        // Predicated region
        $region33: #{tpu_custom_call.1} parent=27 // pred_check
          %p204 = pneg %p93
        $region34: #{tpu_custom_call.1} parent=27 // pred_check_branch
          %206 = sbr.rel (%p204) target = $region36
        $region35: #{tpu_custom_call.1} parent=27 // pred_region
          %208 = dma.done %s200, 32
        $region36: #{tpu_custom_call.1} parent=27 // pred_fallthru
          _
        %s209 = sand.u32 %s50, 1
        %s210 = scalar_lea.sflag [#allocation6], %s209
        %s211 = sand.u32 %s50, 1
        %s212 = smul.addr %s211, 8
        %s213 = scalar_lea.vmem [#allocation5], %s212
        %p214 = pneg %p63
        %p215 = pneg %p60
        %s216 = sand.u32 %s80, 1
        %s217 = scalar_lea.sflag [#allocation8], %s216
        %s218 = sand.u32 %s80, 1
        %s219 = smul.addr %s218, 2
        %s220 = scalar_lea.vmem [#allocation7], %s219
        %p221 = pneg %p93
        %p222 = pneg %p90
        %p223 = pneg %p121
        %p224 = pneg %p118
        %s225 = sadd.s32 %s24, %s25
        %p226 = scmp.lt.s32.totalorder %s225, 1
        %s227 = scalar_select %p226, %s225, 1
        %s228 = smul.addr %s227, 8
        %s229 = scalar_lea.vmem %s2, %s228
        %s230 = sadd.s32 %s25, %s26
        %s231 = sadd.s32 %s25, %s26
        %s232 = sadd.s32 %s24, %s25
        %p233 = scmp.lt.s32.totalorder %s232, 1
        %s234 = scalar_select %p233, %s232, 1
        %s235 = smul.addr %s234, 8
        %s236 = scalar_lea.vmem %s2, %s235
        %s237 = sadd.s32 %s24, %s25
        %p238 = scmp.eq.s32.totalorder %s26, 0
        // Predicated region
        $region37: #{tpu_custom_call.1} parent=27 // pred_check
          %p239 = pneg %p238
        $region38: #{tpu_custom_call.1} parent=27 // pred_check_branch
          %241 = sbr.rel (%p239) target = $region40
        $region39: #{tpu_custom_call.1} parent=27 // pred_region
          %vm242 = vcmask 31744
          %243 = vst.msk [vmem:[#allocation4] sm:$0xff] %vm242, 0.0
          %v244 = vlaneseq
          %v245 = vshrl.u32 %v244, 7
          %v246 = vshra.s32 %v245, 1
          %247 = vst [vmem:[#allocation2] sm:$0xff] %v246
          %v248 = vand.u32 %v245, 1
          %249 = vst [vmem:[#allocation3] sm:$0xff] %v248
        $region40: #{tpu_custom_call.1} parent=27 // pred_fallthru
          _
        %v250 = vld [vmem:[%s193] sm:$0xff]
        %v251 = vld [vmem:[#allocation2] sm:$0xff]
        %v252 = vld [vmem:[#allocation3] sm:$0xff]
        %v253 = vld [vmem:[%s203 + $0x1] sm:$0x1]
        %v254 = vld [vmem:[%s203] sm:$0x1]
        %vm255 = vcmp.eq.s32.totalorder %v252, 0
        %v256 = vperm.slane %v254, 0
        %v257 = vperm.slane %v253, 0
        %v258 = vsel %vm255, %v256, %v257
        %vm259 = vcmp.eq.s32.totalorder %v258, %v251
        %v260 = vsel %vm259, 1, 0
        %v261 = vcvt.s32.f32 %v260
        %v262 = vrot.slane %v250, 6
        %v263 = vmax.f32 %v250, %v262
        %v264 = vrot.slane %v263, 4
        %v265 = vmax.f32 %v263, %v264
        %v266 = vsub.f32 %v250, %v265
        %v267 = vmul.f32 %v266, 1.442695
        %v268 = vpow.pop %v267
        %v269 = vrot.slane %v268, 6
        %v270 = vadd.f32 %v268, %v269
        %v271 = vrot.slane %v270, 4
        %v272 = vadd.f32 %v270, %v271
        %v273 = vrcp.pop %v272
        %v274 = vmul.f32 %v272, %v273
        %v275 = vsub.f32 1.0, %v274
        %v276 = vmul.f32 %v273, %v275
        %v277 = vadd.f32 %v273, %v276
        %vm278 = vweird.f32 %v272
        %vm279 = vweird.f32 %v273
        %vm280 = vmor %vm278, %vm279
        %v281 = vsel %vm280, %v273, %v277
        %v282 = vand.u32 2147483647, %v272
        %vm283 = vcmp.eq.f32.partialorder %v282, 8.507059e+37
        %v284 = vand.u32 %v272, 2147483648
        %v285 = vor.u32 1.1754944e-38, %v284
        %v286 = vsel %vm283, %v285, %v281
        %v287 = vmul.f32 %v268, %v286
        %v288 = vlog2.pop %v272
        %v289 = vmul.f32 %v288, 0.6931472
        %v290 = vsub.f32 %v289, %v266
        %v291 = vld [vmem:[#allocation4] sm:$0xff]
        %v292 = vmul.f32 %v287, %v261
        %293 = vadd.xlane.f32.xlu0 %v292
        %v294 = vpop.xlane.xlu0 %293
        %v295 = vadd.f32 %v291, %v294
        %vm296 = vcmask 7168
        %297 = vst.msk [vmem:[#allocation4] sm:$0xff] %vm296, %v295
        %v298 = vld [vmem:[#allocation4] sm:$0xff]
        %299 = vadd.xlane.f32.xlu0 %v261
        %v300 = vpop.xlane.xlu0 %299
        %v301 = vadd.f32 %v298, %v300
        %vm302 = vcmask 15368
        %303 = vst.msk [vmem:[#allocation4] sm:$0xff] %vm302, %v301
        %v304 = vld [vmem:[#allocation4] sm:$0xff]
        %v305 = vmul.f32 %v287, %v287
        %306 = vadd.xlane.f32.xlu0 %v305
        %v307 = vpop.xlane.xlu0 %306
        %v308 = vadd.f32 %v304, %v307
        %vm309 = vcmask 23568
        %310 = vst.msk [vmem:[#allocation4] sm:$0xff] %vm309, %v308
        %v311 = vld [vmem:[#allocation4] sm:$0xff]
        %v312 = vmul.f32 %v261, %v290
        %313 = vadd.xlane.f32.xlu0 %v312
        %v314 = vpop.xlane.xlu0 %313
        %v315 = vadd.f32 %v311, %v314
        %vm316 = vcmask 31768
        %317 = vst.msk [vmem:[#allocation4] sm:$0xff] %vm316, %v315
        // Predicated region
        $region41: #{tpu_custom_call.1} parent=27 // pred_check
          %p318 = pneg %p238
        $region42: #{tpu_custom_call.1} parent=27 // pred_check_branch
          %320 = sbr.rel (%p318) target = $region44
        $region43: #{tpu_custom_call.1} parent=27 // pred_region
          %v321 = vld [vmem:[#allocation4] sm:$0xff]
          %vm322 = vcmask 31744
          %323 = vst.msk [vmem:[%s236] sm:$0xff] %vm322, %v321
        $region44: #{tpu_custom_call.1} parent=27 // pred_fallthru
          _
        %s324 = sadd.s32 %s24, %s25
        %p325 = scmp.lt.s32.totalorder %s324, 1
        %s326 = scalar_select %p325, %s324, 1
        %s327 = smul.addr %s326, 8
        %s328 = scalar_lea.vmem %s2, %s327
        // Predicated region
        $region45: #{tpu_custom_call.1} parent=27 // pred_check
          %p329 = pneg %p118
        $region46: #{tpu_custom_call.1} parent=27 // pred_check_branch
          %331 = sbr.rel (%p329) target = $region48
        $region47: #{tpu_custom_call.1} parent=27 // pred_region
          %s332 = sadd.s32 %s24, %s25
        $region48: #{tpu_custom_call.1} parent=27 // pred_fallthru
          _
      $region28: #{tpu_custom_call.1} parent=5 // pred_fallthru
        _
      %p333 = scmp.le.s32.totalorder 2, %s14
      // Predicated region
      $region49: #{tpu_custom_call.1} parent=5 // pred_check
        %p334 = pneg %p333
      $region50: #{tpu_custom_call.1} parent=5 // pred_check_branch
        %336 = sbr.rel (%p334) target = $region52
      $region51: #{tpu_custom_call.1} parent=5 // pred_region
        %s337 = ssub.s32 %s14, 2
        // Predicated region
        $region53: #{tpu_custom_call.1} parent=51 // pred_check
          %p338 = pneg %p124
        $region54: #{tpu_custom_call.1} parent=51 // pred_check_branch
          %340 = sbr.rel (%p338) target = $region56
        $region55: #{tpu_custom_call.1} parent=51 // pred_region
          %s341 = sadd.s32 %s27, %s28
          %p342 = scmp.lt.s32.totalorder %s341, 1
          %s343 = scalar_select %p342, %s341, 1
          %s344 = smul.addr %s343, 8
          %s345 = scalar_lea.vmem %s2, %s344
        $region56: #{tpu_custom_call.1} parent=51 // pred_fallthru
          _
      $region52: #{tpu_custom_call.1} parent=5 // pred_fallthru
        _
    $region6: #{tpu_custom_call.1} parent=1 // loop_footer
      %s18 = sadd.s32 1, %s14
    $region7: #{tpu_custom_call.1} parent=1 // loop_footer_branch
      %13 = sbr.rel target = $region3
    $region8: #{tpu_custom_call.1} parent=1 // loop_exit
      _
    %346 = vsyncpa [#allocation6], 1
    %s347 = scalar_lea.sflag [#allocation6], 1
    %348 = vsyncpa %s347, 1
    %349 = vsyncpa [#allocation8], 1
    %s350 = scalar_lea.sflag [#allocation8], 1
    %351 = vsyncpa %s350, 1

</llo_original>
